<compile_context>
chip_gen: v6e
topology: v6e:2x2x1
jax: 0.10.0
libtpu: 0.0.40
codegen_flags: <defaults>
</compile_context>

<pallas_src>
import functools

import jax
import jax.numpy as jnp
from jax import lax
from jax.experimental import pallas as pl
from jax.experimental.pallas import tpu as pltpu

_LANE = 128


def _linear_kernel(x_ref, w_ref, b_ref, o_ref, acc_ref, *, tile_f, f_total, mask_tail_f):
    # x_ref:  (TILE_N, TILE_F) VMEM   (streamed batch x feature tiles)
    # w_ref:  (1, TILE_F)      VMEM   (lane-dense weight row)
    # b_ref:  (1, 1)           SMEM   (bias scalar)
    # o_ref:  (1, TILE_N)      VMEM   (lane-dense output row for this batch tile)
    # acc_ref:(1, TILE_N) f32  VMEM scratch accumulator (resident across the K axis)
    k = pl.program_id(1)

    @pl.when(k == 0)
    def _():
        acc_ref[...] = jnp.zeros_like(acc_ref)

    x = x_ref[...].astype(jnp.float32)
    w = w_ref[...].astype(jnp.float32)

    if mask_tail_f:
        # F % tile_f != 0: the last K block of x / w has out-of-bounds lanes whose
        # contents are undefined (possibly NaN). Zero both so they contribute 0.
        lane = lax.broadcasted_iota(jnp.int32, (1, tile_f), 1)
        valid = lane < (f_total - k * tile_f)
        x = jnp.where(valid, x, 0.0)
        w = jnp.where(valid, w, 0.0)

    # (1, tile_f) . (tile_n, tile_f)^T -> (1, tile_n): the reduction over F lands
    # directly in lane-dense form (no sublane-major (tile_n,1) intermediate).
    acc_ref[...] += lax.dot_general(
        w, x,
        dimension_numbers=(((1,), (1,)), ((), ())),
        precision=lax.Precision.HIGHEST,          # full f32 accuracy (matches torch Linear)
        preferred_element_type=jnp.float32,
    )

    @pl.when(k == pl.num_programs(1) - 1)
    def _():
        o_ref[...] = (acc_ref[...] + b_ref[0, 0]).astype(o_ref.dtype)


def linear_regression_forward(x, w, b, *, target_buffer_bytes=4 << 20):
    """x: (N, F); w: (1, F) torch nn.Linear weight layout; b: (1,) -> (N, 1)."""
    N, F = x.shape
    assert w.shape == (1, F)
    itemsize = jnp.dtype(x.dtype).itemsize

    def _round_up(v, m):
        return ((v + m - 1) // m) * m

    # Lane-padded width actually resident in VMEM for an x block.
    padded_f = _round_up(F, _LANE)

    # --- choose tile_f: split F only when a (256, padded_f) block would not fit the
    #     per-buffer budget; otherwise a single K step (tile_f == F). ---
    min_tile_n = 256
    if min_tile_n * padded_f * itemsize <= target_buffer_bytes:
        tile_f, padded_tf = F, padded_f
    else:
        padded_tf = max(_LANE,
                        (target_buffer_bytes // (min_tile_n * itemsize)) // _LANE * _LANE)
        padded_tf = min(padded_tf, padded_f)
        tile_f = padded_tf

    # --- choose tile_n by *padded* bytes, 128-aligned, capped by the batch. ---
    tile_n = target_buffer_bytes // (padded_tf * itemsize)
    tile_n = max(_LANE, (tile_n // _LANE) * _LANE)
    tile_n = min(tile_n, 8192)
    tile_n = min(tile_n, _round_up(N, _LANE))

    num_n = pl.cdiv(N, tile_n)   # ragged tail handled by Pallas partial blocks (no jnp.pad copy)
    num_k = pl.cdiv(F, tile_f)
    mask_tail_f = (F % tile_f) != 0

    kernel = functools.partial(
        _linear_kernel, tile_f=tile_f, f_total=F, mask_tail_f=mask_tail_f)

    b2d = b.reshape(1, 1).astype(jnp.float32)

    out = pl.pallas_call(
        kernel,
        out_shape=jax.ShapeDtypeStruct((1, num_n * tile_n), x.dtype),
        grid_spec=pltpu.PrefetchScalarGridSpec(
            num_scalar_prefetch=0,
            grid=(num_n, num_k),
            in_specs=[
                pl.BlockSpec((tile_n, tile_f), lambda i, k: (i, k)),    # x: streamed tiles
                pl.BlockSpec((1, tile_f), lambda i, k: (0, k)),         # weight row
                pl.BlockSpec(memory_space=pltpu.MemorySpace.SMEM),      # bias scalar in SMEM
            ],
            out_specs=pl.BlockSpec((1, tile_n), lambda i, k: (0, i)),   # lane-dense output row
            scratch_shapes=[pltpu.VMEM((1, tile_n), jnp.float32)],      # f32 accumulator
        ),
        compiler_params=pltpu.CompilerParams(
            # batch tiles independent -> both TensorCores on v7x; K axis is the reduction.
            dimension_semantics=("parallel", "arbitrary"),
            vmem_limit_bytes=32 << 20,   # actual footprint ~10 MiB; safe on v7x's 64 MiB
        ),
    )(x, w, b2d)

    return out[0, :N].reshape(N, 1)


if __name__ == "__main__":
    key = jax.random.PRNGKey(0)
    k_x, k_w, k_b, k_x2, k_w2 = jax.random.split(key, 5)

    # Small demo shapes for torch.nn.Linear(in_features=32, out_features=1).
    N, in_features = 256, 32
    bound = 1.0 / jnp.sqrt(jnp.float32(in_features))
    w = jax.random.uniform(k_w, (1, in_features), jnp.float32, -bound, bound)  # torch (out, in)
    b = jax.random.uniform(k_b, (1,), jnp.float32, -bound, bound)
    x = jax.random.normal(k_x, (N, in_features), jnp.float32)

    y = linear_regression_forward(x, w, b)
    jax.block_until_ready(y)

    # Exact-f32 reference (same math as torch Linear, no matmul-precision ambiguity).
    y_ref = jnp.sum(x * w, axis=-1, keepdims=True) + b
    assert y.shape == (N, 1)
    assert jnp.allclose(y, y_ref, atol=1e-4, rtol=1e-4)

    # Second shape: in_features not a multiple of 128 (exercises lane-padded budget path).
    N2, F2 = 512, 160
    bound2 = 1.0 / jnp.sqrt(jnp.float32(F2))
    x2 = jax.random.normal(k_x2, (N2, F2), jnp.float32)
    w2 = jax.random.uniform(k_w2, (1, F2), jnp.float32, -bound2, bound2)
    y2 = linear_regression_forward(x2, w2, b)
    jax.block_until_ready(y2)
    y2_ref = jnp.sum(x2 * w2, axis=-1, keepdims=True) + b
    assert jnp.allclose(y2, y2_ref, atol=1e-4, rtol=1e-4)

    print("KERNEL_OK")
</pallas_src>

<mosaic_0001>
module attributes {stable_mosaic.version = 11 : i64} {
  func.func @_linear_kernel(%arg0: i32, %arg1: i32, %arg2: memref<256x32xf32, #tpu.memory_space<vmem>>, %arg3: memref<1x32xf32, #tpu.memory_space<vmem>>, %arg4: memref<1x1xf32, #tpu.memory_space<smem>>, %arg5: memref<1x256xf32, #tpu.memory_space<vmem>>, %arg6: memref<1x256xf32, #tpu.memory_space<vmem>>) attributes {dimension_semantics = [#tpu.dimension_semantics<parallel>, #tpu.dimension_semantics<arbitrary>], iteration_bounds = array<i64: 1, 1>, scalar_prefetch = 0 : i64, scratch_operands = 1 : i64, tpu.core_type = #tpu.core_type<tc>, window_params = [{transform_indices = @transform_0, window_bounds = array<i64: 256, 32>}, {transform_indices = @transform_1, window_bounds = array<i64: 1, 32>}, {transform_indices = @transform_2, window_bounds = array<i64: 1, 1>}, {transform_indices = @transform_3, window_bounds = array<i64: 1, 256>}]} {
    %c0_i32 = arith.constant 0 : i32
    %0 = arith.cmpi eq, %arg1, %c0_i32 : i32
    %1 = arith.extui %0 : i1 to i32
    %c0_i32_0 = arith.constant 0 : i32
    %2 = arith.cmpi ne, %1, %c0_i32_0 : i32
    scf.if %2 {
      %cst_10 = arith.constant 0.000000e+00 : f32
      %12 = vector.broadcast %cst_10 : f32 to vector<1x256xf32>
      %c0_11 = arith.constant 0 : index
      %c0_12 = arith.constant 0 : index
      %13 = vector.load %arg6[%c0_11, %c0_12] : memref<1x256xf32, #tpu.memory_space<vmem>>, vector<1x256xf32>
      tpu.vector_store %arg6[%c0_11, %c0_12], %12 {strides = array<i32>} : memref<1x256xf32, #tpu.memory_space<vmem>>, vector<1x256xf32>,
    } else {
    }
    %c0 = arith.constant 0 : index
    %c0_1 = arith.constant 0 : index
    %3 = vector.load %arg2[%c0, %c0_1] : memref<256x32xf32, #tpu.memory_space<vmem>>, vector<256x32xf32>
    %c0_2 = arith.constant 0 : index
    %c0_3 = arith.constant 0 : index
    %4 = vector.load %arg3[%c0_2, %c0_3] : memref<1x32xf32, #tpu.memory_space<vmem>>, vector<1x32xf32>
    %c0_4 = arith.constant 0 : index
    %c0_5 = arith.constant 0 : index
    %5 = vector.load %arg6[%c0_4, %c0_5] : memref<1x256xf32, #tpu.memory_space<vmem>>, vector<1x256xf32>
    %cst = arith.constant dense<0.000000e+00> : vector<1x256xf32>
    %6 = tpu.matmul %4, %3, %cst {dimension_numbers = #tpu.dot_dimension_numbers<[1], [1], [0], [0], [0, 0, 1, 0], [], []>, precision = #tpu.contract_precision<fp32>} : vector<1x32xf32>, vector<256x32xf32>, vector<1x256xf32> -> vector<1x256xf32>
    %7 = arith.addf %5, %6 : vector<1x256xf32>
    %c0_6 = arith.constant 0 : index
    %c0_7 = arith.constant 0 : index
    %8 = vector.load %arg6[%c0_6, %c0_7] : memref<1x256xf32, #tpu.memory_space<vmem>>, vector<1x256xf32>
    tpu.vector_store %arg6[%c0_6, %c0_7], %7 {strides = array<i32>} : memref<1x256xf32, #tpu.memory_space<vmem>>, vector<1x256xf32>,
    %c0_i32_8 = arith.constant 0 : i32
    %9 = arith.cmpi eq, %arg1, %c0_i32_8 : i32
    %10 = arith.extui %9 : i1 to i32
    %c0_i32_9 = arith.constant 0 : i32
    %11 = arith.cmpi ne, %10, %c0_i32_9 : i32
    scf.if %11 {
      %c0_10 = arith.constant 0 : index
      %c0_11 = arith.constant 0 : index
      %12 = vector.load %arg6[%c0_10, %c0_11] : memref<1x256xf32, #tpu.memory_space<vmem>>, vector<1x256xf32>
      %c0_12 = arith.constant 0 : index
      %c0_13 = arith.constant 0 : index
      %13 = memref.load %arg4[%c0_12, %c0_13] : memref<1x1xf32, #tpu.memory_space<smem>>
      %14 = vector.broadcast %13 : f32 to vector<1x256xf32>
      %15 = arith.addf %12, %14 : vector<1x256xf32>
      %c0_14 = arith.constant 0 : index
      %c0_15 = arith.constant 0 : index
      %16 = vector.load %arg5[%c0_14, %c0_15] : memref<1x256xf32, #tpu.memory_space<vmem>>, vector<1x256xf32>
      tpu.vector_store %arg5[%c0_14, %c0_15], %15 {strides = array<i32>} : memref<1x256xf32, #tpu.memory_space<vmem>>, vector<1x256xf32>,
    } else {
    }
    return
  }
  func.func @transform_0(%arg0: i32, %arg1: i32) -> (i32, i32) {
    %c0_i32 = arith.constant 0 : i32
    return %arg0, %arg1 : i32, i32
  }
  func.func @transform_1(%arg0: i32, %arg1: i32) -> (i32, i32) {
    %c0_i32 = arith.constant 0 : i32
    %c0_i32_0 = arith.constant 0 : i32
    return %c0_i32, %arg1 : i32, i32
  }
  func.func @transform_2(%arg0: i32, %arg1: i32) -> (i32, i32) {
    %c0_i32 = arith.constant 0 : i32
    %c0_i32_0 = arith.constant 0 : i32
    %c0_i32_1 = arith.constant 0 : i32
    return %c0_i32, %c0_i32_0 : i32, i32
  }
  func.func @transform_3(%arg0: i32, %arg1: i32) -> (i32, i32) {
    %c0_i32 = arith.constant 0 : i32
    %c0_i32_0 = arith.constant 0 : i32
    return %c0_i32, %arg0 : i32, i32
  }
}

</mosaic_0001>

<llo_original>
// kernel: tpu_custom_call.1
$region0: #{tpu_custom_call.1}
  #allocation0 [shape = 'u32[]', space=smem, size = 0x4, offset = 0x4, fixed_abs, tag = 'smem constant byte address 0x4 - core index']
  #allocation1 [shape = 'u32[144,128]{1,0:T(1,128)}', space=vmem, size = 0x12000, scoped, tag = 'internal scratch']
  #allocation2 [shape = 'f32[1,256]{1,0:T(1,128)}', space=vmem, size = 0x400, scoped, tag = 'scratch operand']
  #allocation3 [shape = 'f32[1,1]{1,0:T(1,128)S(6)}', space=smem, size = 0x200, scoped, tag = 'scoped memory for tpu_custom_call.1']
  %s0 = inlined_call_operand.vmem [shape: f32[256,32], index: 0, kind: input, shape index: {}]
  %s1 = inlined_call_operand.vmem [shape: f32[1,32], index: 1, kind: input, shape index: {}]
  %s2 = inlined_call_operand.<no memory space> [shape: f32[1,1], index: 2, kind: input, shape index: {}]
  %s3 = inlined_call_operand.hbm [shape: f32[1,256], index: 3, kind: output, shape index: {}]
  %s4 = sld [smem:[#allocation0]]
  $region30: #{tpu_custom_call.1} parent=0
    _
  %s6 = ssub.s32 1, %s4
  %s7 = scalar_select 0, %s6, %s4
  %8 = sst [smem:[#allocation3]] %s2
  $region1: #{tpu_custom_call.1} parent=0
    #allocation4 [shape = 'u8[1024]{0}', space=vmem, size = 0x400, scoped, tag = 'output window, operand 0, single buffered']
    #allocation5 [shape = 's32[1]{0}', space=sflag, size = 0x4, scoped, tag = 'scoped memory for tpu_custom_call.1']
    %9 = vsyncpa [#allocation5], 0
    // Predicated region
    $region2: #{tpu_custom_call.1} parent=1 // pred_check
      _
    $region3: #{tpu_custom_call.1} parent=1 // pred_check_branch
      %11 = sbr.rel (0) target = $region5
    $region4: #{tpu_custom_call.1} parent=1 // pred_region
      _
    $region5: #{tpu_custom_call.1} parent=1 // pred_fallthru
      _
    // Predicated region
    $region6: #{tpu_custom_call.1} parent=1 // pred_check
      _
    $region7: #{tpu_custom_call.1} parent=1 // pred_check_branch
      %13 = sbr.rel (0) target = $region9
    $region8: #{tpu_custom_call.1} parent=1 // pred_region
      _
    $region9: #{tpu_custom_call.1} parent=1 // pred_fallthru
      _
    // Predicated region
    $region10: #{tpu_custom_call.1} parent=1 // pred_check
      _
    $region11: #{tpu_custom_call.1} parent=1 // pred_check_branch
      %15 = sbr.rel (0) target = $region13
    $region12: #{tpu_custom_call.1} parent=1 // pred_region
      _
    $region13: #{tpu_custom_call.1} parent=1 // pred_fallthru
      _
    %p16 = scmp.eq.s32.totalorder 0, 0
    // Predicated region
    $region14: #{tpu_custom_call.1} parent=1 // pred_check
      %p17 = pneg %p16
    $region15: #{tpu_custom_call.1} parent=1 // pred_check_branch
      %19 = sbr.rel (%p17) target = $region17
    $region16: #{tpu_custom_call.1} parent=1 // pred_region
      %v20 = vlaneseq
      %vm21 = vcmp.ge.s32.totalorder %v20, 0
      %vm22 = vcmp.lt.s32.totalorder %v20, 256
      %vm23 = vmand %vm21, %vm22
      %24 = vst.msk [vmem:[#allocation2] sm:$0x3] %vm23, 0.0
    $region17: #{tpu_custom_call.1} parent=1 // pred_fallthru
      _
    %v25 = vld [vmem:[%s0] sm:$0xff]
    %v26 = vld [vmem:[%s0 + $0x8] sm:$0xff]
    %v27 = vld [vmem:[%s0 + $0x10] sm:$0xff]
    %v28 = vld [vmem:[%s0 + $0x18] sm:$0xff]
    %v29 = vld [vmem:[%s0 + $0x20] sm:$0xff]
    %v30 = vld [vmem:[%s0 + $0x28] sm:$0xff]
    %v31 = vld [vmem:[%s0 + $0x30] sm:$0xff]
    %v32 = vld [vmem:[%s0 + $0x38] sm:$0xff]
    %v33 = vld [vmem:[%s0 + $0x40] sm:$0xff]
    %v34 = vld [vmem:[%s0 + $0x48] sm:$0xff]
    %v35 = vld [vmem:[%s0 + $0x50] sm:$0xff]
    %v36 = vld [vmem:[%s0 + $0x58] sm:$0xff]
    %v37 = vld [vmem:[%s0 + $0x60] sm:$0xff]
    %v38 = vld [vmem:[%s0 + $0x68] sm:$0xff]
    %v39 = vld [vmem:[%s0 + $0x70] sm:$0xff]
    %v40 = vld [vmem:[%s0 + $0x78] sm:$0xff]
    %v41 = vld [vmem:[%s0 + $0x80] sm:$0xff]
    %v42 = vld [vmem:[%s0 + $0x88] sm:$0xff]
    %v43 = vld [vmem:[%s0 + $0x90] sm:$0xff]
    %v44 = vld [vmem:[%s0 + $0x98] sm:$0xff]
    %v45 = vld [vmem:[%s0 + $0xa0] sm:$0xff]
    %v46 = vld [vmem:[%s0 + $0xa8] sm:$0xff]
    %v47 = vld [vmem:[%s0 + $0xb0] sm:$0xff]
    %v48 = vld [vmem:[%s0 + $0xb8] sm:$0xff]
    %v49 = vld [vmem:[%s0 + $0xc0] sm:$0xff]
    %v50 = vld [vmem:[%s0 + $0xc8] sm:$0xff]
    %v51 = vld [vmem:[%s0 + $0xd0] sm:$0xff]
    %v52 = vld [vmem:[%s0 + $0xd8] sm:$0xff]
    %v53 = vld [vmem:[%s0 + $0xe0] sm:$0xff]
    %v54 = vld [vmem:[%s0 + $0xe8] sm:$0xff]
    %v55 = vld [vmem:[%s0 + $0xf0] sm:$0xff]
    %v56 = vld [vmem:[%s0 + $0xf8] sm:$0xff]
    %v57 = vld [vmem:[%s1] sm:$0x1]
    %v58 = vld [vmem:[#allocation2] sm:$0x3]
    %vm59 = vcmask 261120
    %v61 = vsel %vm59, %v57, 0
    %v64 = vsel %vm59, %v25, 0
    %v67 = vsel %vm59, %v26, 0
    %v70 = vsel %vm59, %v27, 0
    %v73 = vsel %vm59, %v28, 0
    %v76 = vsel %vm59, %v29, 0
    %v79 = vsel %vm59, %v30, 0
    %v82 = vsel %vm59, %v31, 0
    %v85 = vsel %vm59, %v32, 0
    %v88 = vsel %vm59, %v33, 0
    %v91 = vsel %vm59, %v34, 0
    %v94 = vsel %vm59, %v35, 0
    %v97 = vsel %vm59, %v36, 0
    %v100 = vsel %vm59, %v37, 0
    %v103 = vsel %vm59, %v38, 0
    %v106 = vsel %vm59, %v39, 0
    %v109 = vsel %vm59, %v40, 0
    %v112 = vsel %vm59, %v41, 0
    %v115 = vsel %vm59, %v42, 0
    %v118 = vsel %vm59, %v43, 0
    %v121 = vsel %vm59, %v44, 0
    %v124 = vsel %vm59, %v45, 0
    %v127 = vsel %vm59, %v46, 0
    %v130 = vsel %vm59, %v47, 0
    %v133 = vsel %vm59, %v48, 0
    %v136 = vsel %vm59, %v49, 0
    %v139 = vsel %vm59, %v50, 0
    %v142 = vsel %vm59, %v51, 0
    %v145 = vsel %vm59, %v52, 0
    %v148 = vsel %vm59, %v53, 0
    %v151 = vsel %vm59, %v54, 0
    %v154 = vsel %vm59, %v55, 0
    %v157 = vsel %vm59, %v56, 0
    %159 = vmatprep.subr.mxu0 0.0
    %v160 = vand.u32 %v109, 4294901760
    %161 = vmatpush1.xpose.msra.mxu0 %v160
    %162 = vmatprep.subr.mxu0 0.0
    %v163 = vand.u32 %v106, 4294901760
    %164 = vmatpush1.xpose.msra.mxu0 %v163
    %165 = vmatprep.subr.mxu0 0.0
    %v166 = vand.u32 %v103, 4294901760
    %167 = vmatpush1.xpose.msra.mxu0 %v166
    %168 = vmatprep.subr.mxu0 0.0
    %v169 = vand.u32 %v100, 4294901760
    %170 = vmatpush1.xpose.msra.mxu0 %v169
    %171 = vmatprep.subr.mxu0 0.0
    %v172 = vand.u32 %v97, 4294901760
    %173 = vmatpush1.xpose.msra.mxu0 %v172
    %174 = vmatprep.subr.mxu0 0.0
    %v175 = vand.u32 %v94, 4294901760
    %176 = vmatpush1.xpose.msra.mxu0 %v175
    %177 = vmatprep.subr.mxu0 0.0
    %v178 = vand.u32 %v91, 4294901760
    %179 = vmatpush1.xpose.msra.mxu0 %v178
    %180 = vmatprep.subr.mxu0 0.0
    %v181 = vand.u32 %v88, 4294901760
    %182 = vmatpush1.xpose.msra.mxu0 %v181
    %183 = vmatprep.subr.mxu0 0.0
    %v184 = vand.u32 %v85, 4294901760
    %185 = vmatpush1.xpose.msra.mxu0 %v184
    %186 = vmatprep.subr.mxu0 0.0
    %v187 = vand.u32 %v82, 4294901760
    %188 = vmatpush1.xpose.msra.mxu0 %v187
    %189 = vmatprep.subr.mxu0 0.0
    %v190 = vand.u32 %v79, 4294901760
    %191 = vmatpush1.xpose.msra.mxu0 %v190
    %192 = vmatprep.subr.mxu0 0.0
    %v193 = vand.u32 %v76, 4294901760
    %194 = vmatpush1.xpose.msra.mxu0 %v193
    %195 = vmatprep.subr.mxu0 0.0
    %v196 = vand.u32 %v73, 4294901760
    %197 = vmatpush1.xpose.msra.mxu0 %v196
    %198 = vmatprep.subr.mxu0 0.0
    %v199 = vand.u32 %v70, 4294901760
    %200 = vmatpush1.xpose.msra.mxu0 %v199
    %201 = vmatprep.subr.mxu0 0.0
    %v202 = vand.u32 %v67, 4294901760
    %203 = vmatpush1.xpose.msra.mxu0 %v202
    %204 = vmatprep.subr.mxu0 0.0
    %v205 = vand.u32 %v64, 4294901760
    %206 = vmatpush1.xpose.msra.mxu0 %v205
    %207 = vmatprep.subr.mxu0 0.0
    %v208 = vand.u32 %v157, 4294901760
    %209 = vmatpush2.xpose.msra.mxu0 %v208
    %210 = vmatprep.subr.mxu0 0.0
    %v211 = vand.u32 %v154, 4294901760
    %212 = vmatpush2.xpose.msra.mxu0 %v211
    %213 = vmatprep.subr.mxu0 0.0
    %v214 = vand.u32 %v151, 4294901760
    %215 = vmatpush2.xpose.msra.mxu0 %v214
    %216 = vmatprep.subr.mxu0 0.0
    %v217 = vand.u32 %v148, 4294901760
    %218 = vmatpush2.xpose.msra.mxu0 %v217
    %219 = vmatprep.subr.mxu0 0.0
    %v220 = vand.u32 %v145, 4294901760
    %221 = vmatpush2.xpose.msra.mxu0 %v220
    %222 = vmatprep.subr.mxu0 0.0
    %v223 = vand.u32 %v142, 4294901760
    %224 = vmatpush2.xpose.msra.mxu0 %v223
    %225 = vmatprep.subr.mxu0 0.0
    %v226 = vand.u32 %v139, 4294901760
    %227 = vmatpush2.xpose.msra.mxu0 %v226
    %228 = vmatprep.subr.mxu0 0.0
    %v229 = vand.u32 %v136, 4294901760
    %230 = vmatpush2.xpose.msra.mxu0 %v229
    %231 = vmatprep.subr.mxu0 0.0
    %v232 = vand.u32 %v133, 4294901760
    %233 = vmatpush2.xpose.msra.mxu0 %v232
    %234 = vmatprep.subr.mxu0 0.0
    %v235 = vand.u32 %v130, 4294901760
    %236 = vmatpush2.xpose.msra.mxu0 %v235
    %237 = vmatprep.subr.mxu0 0.0
    %v238 = vand.u32 %v127, 4294901760
    %239 = vmatpush2.xpose.msra.mxu0 %v238
    %240 = vmatprep.subr.mxu0 0.0
    %v241 = vand.u32 %v124, 4294901760
    %242 = vmatpush2.xpose.msra.mxu0 %v241
    %243 = vmatprep.subr.mxu0 0.0
    %v244 = vand.u32 %v121, 4294901760
    %245 = vmatpush2.xpose.msra.mxu0 %v244
    %246 = vmatprep.subr.mxu0 0.0
    %v247 = vand.u32 %v118, 4294901760
    %248 = vmatpush2.xpose.msra.mxu0 %v247
    %249 = vmatprep.subr.mxu0 0.0
    %v250 = vand.u32 %v115, 4294901760
    %251 = vmatpush2.xpose.msra.mxu0 %v250
    %252 = vmatprep.subr.mxu0 0.0
    %v253 = vand.u32 %v112, 4294901760
    %254 = vmatpush2.xpose.msra.mxu0 %v253
    %255 = vmatprep.mubr.f32.mxu0 0.0
    %v256 = vand.u32 %v61, 4294901760
    %v257 = vsub.f32 %v61, %v256
    %v258 = vand.u32 %v257, 4294901760
    %v259 = vsub.f32 %v257, %v258
    %v260 = vand.u32 %v259, 4294901760
    %261 = vmatmul.mubr.f32.gmra.mxu0 %v260
    %v262 = vpop.f32.mrf.mxu0
    %v263 = vadd.f32 0.0, %v262
    %v264 = vpop.f32.mrf.mxu0
    %v265 = vadd.f32 0.0, %v264
    %266 = vdwg.mxu0
    %267 = vmatprep.subr.mxu0 0.0
    %v268 = vand.u32 %v109, 4294901760
    %v269 = vsub.f32 %v109, %v268
    %v270 = vand.u32 %v269, 4294901760
    %v271 = vsub.f32 %v269, %v270
    %v272 = vand.u32 %v271, 4294901760
    %273 = vmatpush1.xpose.msra.mxu0 %v272
    %274 = vmatprep.subr.mxu0 0.0
    %v275 = vand.u32 %v106, 4294901760
    %v276 = vsub.f32 %v106, %v275
    %v277 = vand.u32 %v276, 4294901760
    %v278 = vsub.f32 %v276, %v277
    %v279 = vand.u32 %v278, 4294901760
    %280 = vmatpush1.xpose.msra.mxu0 %v279
    %281 = vmatprep.subr.mxu0 0.0
    %v282 = vand.u32 %v103, 4294901760
    %v283 = vsub.f32 %v103, %v282
    %v284 = vand.u32 %v283, 4294901760
    %v285 = vsub.f32 %v283, %v284
    %v286 = vand.u32 %v285, 4294901760
    %287 = vmatpush1.xpose.msra.mxu0 %v286
    %288 = vmatprep.subr.mxu0 0.0
    %v289 = vand.u32 %v100, 4294901760
    %v290 = vsub.f32 %v100, %v289
    %v291 = vand.u32 %v290, 4294901760
    %v292 = vsub.f32 %v290, %v291
    %v293 = vand.u32 %v292, 4294901760
    %294 = vmatpush1.xpose.msra.mxu0 %v293
    %295 = vmatprep.subr.mxu0 0.0
    %v296 = vand.u32 %v97, 4294901760
    %v297 = vsub.f32 %v97, %v296
    %v298 = vand.u32 %v297, 4294901760
    %v299 = vsub.f32 %v297, %v298
    %v300 = vand.u32 %v299, 4294901760
    %301 = vmatpush1.xpose.msra.mxu0 %v300
    %302 = vmatprep.subr.mxu0 0.0
    %v303 = vand.u32 %v94, 4294901760
    %v304 = vsub.f32 %v94, %v303
    %v305 = vand.u32 %v304, 4294901760
    %v306 = vsub.f32 %v304, %v305
    %v307 = vand.u32 %v306, 4294901760
    %308 = vmatpush1.xpose.msra.mxu0 %v307
    %309 = vmatprep.subr.mxu0 0.0
    %v310 = vand.u32 %v91, 4294901760
    %v311 = vsub.f32 %v91, %v310
    %v312 = vand.u32 %v311, 4294901760
    %v313 = vsub.f32 %v311, %v312
    %v314 = vand.u32 %v313, 4294901760
    %315 = vmatpush1.xpose.msra.mxu0 %v314
    %316 = vmatprep.subr.mxu0 0.0
    %v317 = vand.u32 %v88, 4294901760
    %v318 = vsub.f32 %v88, %v317
    %v319 = vand.u32 %v318, 4294901760
    %v320 = vsub.f32 %v318, %v319
    %v321 = vand.u32 %v320, 4294901760
    %322 = vmatpush1.xpose.msra.mxu0 %v321
    %323 = vmatprep.subr.mxu0 0.0
    %v324 = vand.u32 %v85, 4294901760
    %v325 = vsub.f32 %v85, %v324
    %v326 = vand.u32 %v325, 4294901760
    %v327 = vsub.f32 %v325, %v326
    %v328 = vand.u32 %v327, 4294901760
    %329 = vmatpush1.xpose.msra.mxu0 %v328
    %330 = vmatprep.subr.mxu0 0.0
    %v331 = vand.u32 %v82, 4294901760
    %v332 = vsub.f32 %v82, %v331
    %v333 = vand.u32 %v332, 4294901760
    %v334 = vsub.f32 %v332, %v333
    %v335 = vand.u32 %v334, 4294901760
    %336 = vmatpush1.xpose.msra.mxu0 %v335
    %337 = vmatprep.subr.mxu0 0.0
    %v338 = vand.u32 %v79, 4294901760
    %v339 = vsub.f32 %v79, %v338
    %v340 = vand.u32 %v339, 4294901760
    %v341 = vsub.f32 %v339, %v340
    %v342 = vand.u32 %v341, 4294901760
    %343 = vmatpush1.xpose.msra.mxu0 %v342
    %344 = vmatprep.subr.mxu0 0.0
    %v345 = vand.u32 %v76, 4294901760
    %v346 = vsub.f32 %v76, %v345
    %v347 = vand.u32 %v346, 4294901760
    %v348 = vsub.f32 %v346, %v347
    %v349 = vand.u32 %v348, 4294901760
    %350 = vmatpush1.xpose.msra.mxu0 %v349
    %351 = vmatprep.subr.mxu0 0.0
    %v352 = vand.u32 %v73, 4294901760
    %v353 = vsub.f32 %v73, %v352
    %v354 = vand.u32 %v353, 4294901760
    %v355 = vsub.f32 %v353, %v354
    %v356 = vand.u32 %v355, 4294901760
    %357 = vmatpush1.xpose.msra.mxu0 %v356
    %358 = vmatprep.subr.mxu0 0.0
    %v359 = vand.u32 %v70, 4294901760
    %v360 = vsub.f32 %v70, %v359
    %v361 = vand.u32 %v360, 4294901760
    %v362 = vsub.f32 %v360, %v361
    %v363 = vand.u32 %v362, 4294901760
    %364 = vmatpush1.xpose.msra.mxu0 %v363
    %365 = vmatprep.subr.mxu0 0.0
    %v366 = vand.u32 %v67, 4294901760
    %v367 = vsub.f32 %v67, %v366
    %v368 = vand.u32 %v367, 4294901760
    %v369 = vsub.f32 %v367, %v368
    %v370 = vand.u32 %v369, 4294901760
    %371 = vmatpush1.xpose.msra.mxu0 %v370
    %372 = vmatprep.subr.mxu0 0.0
    %v373 = vand.u32 %v64, 4294901760
    %v374 = vsub.f32 %v64, %v373
    %v375 = vand.u32 %v374, 4294901760
    %v376 = vsub.f32 %v374, %v375
    %v377 = vand.u32 %v376, 4294901760
    %378 = vmatpush1.xpose.msra.mxu0 %v377
    %379 = vmatprep.subr.mxu0 0.0
    %v380 = vand.u32 %v157, 4294901760
    %v381 = vsub.f32 %v157, %v380
    %v382 = vand.u32 %v381, 4294901760
    %v383 = vsub.f32 %v381, %v382
    %v384 = vand.u32 %v383, 4294901760
    %385 = vmatpush2.xpose.msra.mxu0 %v384
    %386 = vmatprep.subr.mxu0 0.0
    %v387 = vand.u32 %v154, 4294901760
    %v388 = vsub.f32 %v154, %v387
    %v389 = vand.u32 %v388, 4294901760
    %v390 = vsub.f32 %v388, %v389
    %v391 = vand.u32 %v390, 4294901760
    %392 = vmatpush2.xpose.msra.mxu0 %v391
    %393 = vmatprep.subr.mxu0 0.0
    %v394 = vand.u32 %v151, 4294901760
    %v395 = vsub.f32 %v151, %v394
    %v396 = vand.u32 %v395, 4294901760
    %v397 = vsub.f32 %v395, %v396
    %v398 = vand.u32 %v397, 4294901760
    %399 = vmatpush2.xpose.msra.mxu0 %v398
    %400 = vmatprep.subr.mxu0 0.0
    %v401 = vand.u32 %v148, 4294901760
    %v402 = vsub.f32 %v148, %v401
    %v403 = vand.u32 %v402, 4294901760
    %v404 = vsub.f32 %v402, %v403
    %v405 = vand.u32 %v404, 4294901760
    %406 = vmatpush2.xpose.msra.mxu0 %v405
    %407 = vmatprep.subr.mxu0 0.0
    %v408 = vand.u32 %v145, 4294901760
    %v409 = vsub.f32 %v145, %v408
    %v410 = vand.u32 %v409, 4294901760
    %v411 = vsub.f32 %v409, %v410
    %v412 = vand.u32 %v411, 4294901760
    %413 = vmatpush2.xpose.msra.mxu0 %v412
    %414 = vmatprep.subr.mxu0 0.0
    %v415 = vand.u32 %v142, 4294901760
    %v416 = vsub.f32 %v142, %v415
    %v417 = vand.u32 %v416, 4294901760
    %v418 = vsub.f32 %v416, %v417
    %v419 = vand.u32 %v418, 4294901760
    %420 = vmatpush2.xpose.msra.mxu0 %v419
    %421 = vmatprep.subr.mxu0 0.0
    %v422 = vand.u32 %v139, 4294901760
    %v423 = vsub.f32 %v139, %v422
    %v424 = vand.u32 %v423, 4294901760
    %v425 = vsub.f32 %v423, %v424
    %v426 = vand.u32 %v425, 4294901760
    %427 = vmatpush2.xpose.msra.mxu0 %v426
    %428 = vmatprep.subr.mxu0 0.0
    %v429 = vand.u32 %v136, 4294901760
    %v430 = vsub.f32 %v136, %v429
    %v431 = vand.u32 %v430, 4294901760
    %v432 = vsub.f32 %v430, %v431
    %v433 = vand.u32 %v432, 4294901760
    %434 = vmatpush2.xpose.msra.mxu0 %v433
    %435 = vmatprep.subr.mxu0 0.0
    %v436 = vand.u32 %v133, 4294901760
    %v437 = vsub.f32 %v133, %v436
    %v438 = vand.u32 %v437, 4294901760
    %v439 = vsub.f32 %v437, %v438
    %v440 = vand.u32 %v439, 4294901760
    %441 = vmatpush2.xpose.msra.mxu0 %v440
    %442 = vmatprep.subr.mxu0 0.0
    %v443 = vand.u32 %v130, 4294901760
    %v444 = vsub.f32 %v130, %v443
    %v445 = vand.u32 %v444, 4294901760
    %v446 = vsub.f32 %v444, %v445
    %v447 = vand.u32 %v446, 4294901760
    %448 = vmatpush2.xpose.msra.mxu0 %v447
    %449 = vmatprep.subr.mxu0 0.0
    %v450 = vand.u32 %v127, 4294901760
    %v451 = vsub.f32 %v127, %v450
    %v452 = vand.u32 %v451, 4294901760
    %v453 = vsub.f32 %v451, %v452
    %v454 = vand.u32 %v453, 4294901760
    %455 = vmatpush2.xpose.msra.mxu0 %v454
    %456 = vmatprep.subr.mxu0 0.0
    %v457 = vand.u32 %v124, 4294901760
    %v458 = vsub.f32 %v124, %v457
    %v459 = vand.u32 %v458, 4294901760
    %v460 = vsub.f32 %v458, %v459
    %v461 = vand.u32 %v460, 4294901760
    %462 = vmatpush2.xpose.msra.mxu0 %v461
    %463 = vmatprep.subr.mxu0 0.0
    %v464 = vand.u32 %v121, 4294901760
    %v465 = vsub.f32 %v121, %v464
    %v466 = vand.u32 %v465, 4294901760
    %v467 = vsub.f32 %v465, %v466
    %v468 = vand.u32 %v467, 4294901760
    %469 = vmatpush2.xpose.msra.mxu0 %v468
    %470 = vmatprep.subr.mxu0 0.0
    %v471 = vand.u32 %v118, 4294901760
    %v472 = vsub.f32 %v118, %v471
    %v473 = vand.u32 %v472, 4294901760
    %v474 = vsub.f32 %v472, %v473
    %v475 = vand.u32 %v474, 4294901760
    %476 = vmatpush2.xpose.msra.mxu0 %v475
    %477 = vmatprep.subr.mxu0 0.0
    %v478 = vand.u32 %v115, 4294901760
    %v479 = vsub.f32 %v115, %v478
    %v480 = vand.u32 %v479, 4294901760
    %v481 = vsub.f32 %v479, %v480
    %v482 = vand.u32 %v481, 4294901760
    %483 = vmatpush2.xpose.msra.mxu0 %v482
    %484 = vmatprep.subr.mxu0 0.0
    %v485 = vand.u32 %v112, 4294901760
    %v486 = vsub.f32 %v112, %v485
    %v487 = vand.u32 %v486, 4294901760
    %v488 = vsub.f32 %v486, %v487
    %v489 = vand.u32 %v488, 4294901760
    %490 = vmatpush2.xpose.msra.mxu0 %v489
    %491 = vmatprep.mubr.f32.mxu0 0.0
    %v492 = vand.u32 %v61, 4294901760
    %493 = vmatmul.mubr.f32.gmra.mxu0 %v492
    %v494 = vpop.f32.mrf.mxu0
    %v495 = vadd.f32 %v263, %v494
    %v496 = vpop.f32.mrf.mxu0
    %v497 = vadd.f32 %v265, %v496
    %498 = vdwg.mxu0
    %499 = vmatprep.subr.mxu0 0.0
    %v500 = vand.u32 %v109, 4294901760
    %v501 = vsub.f32 %v109, %v500
    %502 = vmatpush1.xpose.msra.mxu0 %v501
    %503 = vmatprep.subr.mxu0 0.0
    %v504 = vand.u32 %v106, 4294901760
    %v505 = vsub.f32 %v106, %v504
    %506 = vmatpush1.xpose.msra.mxu0 %v505
    %507 = vmatprep.subr.mxu0 0.0
    %v508 = vand.u32 %v103, 4294901760
    %v509 = vsub.f32 %v103, %v508
    %510 = vmatpush1.xpose.msra.mxu0 %v509
    %511 = vmatprep.subr.mxu0 0.0
    %v512 = vand.u32 %v100, 4294901760
    %v513 = vsub.f32 %v100, %v512
    %514 = vmatpush1.xpose.msra.mxu0 %v513
    %515 = vmatprep.subr.mxu0 0.0
    %v516 = vand.u32 %v97, 4294901760
    %v517 = vsub.f32 %v97, %v516
    %518 = vmatpush1.xpose.msra.mxu0 %v517
    %519 = vmatprep.subr.mxu0 0.0
    %v520 = vand.u32 %v94, 4294901760
    %v521 = vsub.f32 %v94, %v520
    %522 = vmatpush1.xpose.msra.mxu0 %v521
    %523 = vmatprep.subr.mxu0 0.0
    %v524 = vand.u32 %v91, 4294901760
    %v525 = vsub.f32 %v91, %v524
    %526 = vmatpush1.xpose.msra.mxu0 %v525
    %527 = vmatprep.subr.mxu0 0.0
    %v528 = vand.u32 %v88, 4294901760
    %v529 = vsub.f32 %v88, %v528
    %530 = vmatpush1.xpose.msra.mxu0 %v529
    %531 = vmatprep.subr.mxu0 0.0
    %v532 = vand.u32 %v85, 4294901760
    %v533 = vsub.f32 %v85, %v532
    %534 = vmatpush1.xpose.msra.mxu0 %v533
    %535 = vmatprep.subr.mxu0 0.0
    %v536 = vand.u32 %v82, 4294901760
    %v537 = vsub.f32 %v82, %v536
    %538 = vmatpush1.xpose.msra.mxu0 %v537
    %539 = vmatprep.subr.mxu0 0.0
    %v540 = vand.u32 %v79, 4294901760
    %v541 = vsub.f32 %v79, %v540
    %542 = vmatpush1.xpose.msra.mxu0 %v541
    %543 = vmatprep.subr.mxu0 0.0
    %v544 = vand.u32 %v76, 4294901760
    %v545 = vsub.f32 %v76, %v544
    %546 = vmatpush1.xpose.msra.mxu0 %v545
    %547 = vmatprep.subr.mxu0 0.0
    %v548 = vand.u32 %v73, 4294901760
    %v549 = vsub.f32 %v73, %v548
    %550 = vmatpush1.xpose.msra.mxu0 %v549
    %551 = vmatprep.subr.mxu0 0.0
    %v552 = vand.u32 %v70, 4294901760
    %v553 = vsub.f32 %v70, %v552
    %554 = vmatpush1.xpose.msra.mxu0 %v553
    %555 = vmatprep.subr.mxu0 0.0
    %v556 = vand.u32 %v67, 4294901760
    %v557 = vsub.f32 %v67, %v556
    %558 = vmatpush1.xpose.msra.mxu0 %v557
    %559 = vmatprep.subr.mxu0 0.0
    %v560 = vand.u32 %v64, 4294901760
    %v561 = vsub.f32 %v64, %v560
    %562 = vmatpush1.xpose.msra.mxu0 %v561
    %563 = vmatprep.subr.mxu0 0.0
    %v564 = vand.u32 %v157, 4294901760
    %v565 = vsub.f32 %v157, %v564
    %566 = vmatpush2.xpose.msra.mxu0 %v565
    %567 = vmatprep.subr.mxu0 0.0
    %v568 = vand.u32 %v154, 4294901760
    %v569 = vsub.f32 %v154, %v568
    %570 = vmatpush2.xpose.msra.mxu0 %v569
    %571 = vmatprep.subr.mxu0 0.0
    %v572 = vand.u32 %v151, 4294901760
    %v573 = vsub.f32 %v151, %v572
    %574 = vmatpush2.xpose.msra.mxu0 %v573
    %575 = vmatprep.subr.mxu0 0.0
    %v576 = vand.u32 %v148, 4294901760
    %v577 = vsub.f32 %v148, %v576
    %578 = vmatpush2.xpose.msra.mxu0 %v577
    %579 = vmatprep.subr.mxu0 0.0
    %v580 = vand.u32 %v145, 4294901760
    %v581 = vsub.f32 %v145, %v580
    %582 = vmatpush2.xpose.msra.mxu0 %v581
    %583 = vmatprep.subr.mxu0 0.0
    %v584 = vand.u32 %v142, 4294901760
    %v585 = vsub.f32 %v142, %v584
    %586 = vmatpush2.xpose.msra.mxu0 %v585
    %587 = vmatprep.subr.mxu0 0.0
    %v588 = vand.u32 %v139, 4294901760
    %v589 = vsub.f32 %v139, %v588
    %590 = vmatpush2.xpose.msra.mxu0 %v589
    %591 = vmatprep.subr.mxu0 0.0
    %v592 = vand.u32 %v136, 4294901760
    %v593 = vsub.f32 %v136, %v592
    %594 = vmatpush2.xpose.msra.mxu0 %v593
    %595 = vmatprep.subr.mxu0 0.0
    %v596 = vand.u32 %v133, 4294901760
    %v597 = vsub.f32 %v133, %v596
    %598 = vmatpush2.xpose.msra.mxu0 %v597
    %599 = vmatprep.subr.mxu0 0.0
    %v600 = vand.u32 %v130, 4294901760
    %v601 = vsub.f32 %v130, %v600
    %602 = vmatpush2.xpose.msra.mxu0 %v601
    %603 = vmatprep.subr.mxu0 0.0
    %v604 = vand.u32 %v127, 4294901760
    %v605 = vsub.f32 %v127, %v604
    %606 = vmatpush2.xpose.msra.mxu0 %v605
    %607 = vmatprep.subr.mxu0 0.0
    %v608 = vand.u32 %v124, 4294901760
    %v609 = vsub.f32 %v124, %v608
    %610 = vmatpush2.xpose.msra.mxu0 %v609
    %611 = vmatprep.subr.mxu0 0.0
    %v612 = vand.u32 %v121, 4294901760
    %v613 = vsub.f32 %v121, %v612
    %614 = vmatpush2.xpose.msra.mxu0 %v613
    %615 = vmatprep.subr.mxu0 0.0
    %v616 = vand.u32 %v118, 4294901760
    %v617 = vsub.f32 %v118, %v616
    %618 = vmatpush2.xpose.msra.mxu0 %v617
    %619 = vmatprep.subr.mxu0 0.0
    %v620 = vand.u32 %v115, 4294901760
    %v621 = vsub.f32 %v115, %v620
    %622 = vmatpush2.xpose.msra.mxu0 %v621
    %623 = vmatprep.subr.mxu0 0.0
    %v624 = vand.u32 %v112, 4294901760
    %v625 = vsub.f32 %v112, %v624
    %626 = vmatpush2.xpose.msra.mxu0 %v625
    %627 = vmatprep.mubr.f32.mxu0 0.0
    %v628 = vand.u32 %v61, 4294901760
    %v629 = vsub.f32 %v61, %v628
    %630 = vmatmul.mubr.f32.gmra.mxu0 %v629
    %v631 = vpop.f32.mrf.mxu0
    %v632 = vadd.f32 %v495, %v631
    %v633 = vpop.f32.mrf.mxu0
    %v634 = vadd.f32 %v497, %v633
    %635 = vdwg.mxu0
    %636 = vmatprep.subr.mxu0 0.0
    %v637 = vand.u32 %v109, 4294901760
    %638 = vmatpush1.xpose.msra.mxu0 %v637
    %639 = vmatprep.subr.mxu0 0.0
    %v640 = vand.u32 %v106, 4294901760
    %641 = vmatpush1.xpose.msra.mxu0 %v640
    %642 = vmatprep.subr.mxu0 0.0
    %v643 = vand.u32 %v103, 4294901760
    %644 = vmatpush1.xpose.msra.mxu0 %v643
    %645 = vmatprep.subr.mxu0 0.0
    %v646 = vand.u32 %v100, 4294901760
    %647 = vmatpush1.xpose.msra.mxu0 %v646
    %648 = vmatprep.subr.mxu0 0.0
    %v649 = vand.u32 %v97, 4294901760
    %650 = vmatpush1.xpose.msra.mxu0 %v649
    %651 = vmatprep.subr.mxu0 0.0
    %v652 = vand.u32 %v94, 4294901760
    %653 = vmatpush1.xpose.msra.mxu0 %v652
    %654 = vmatprep.subr.mxu0 0.0
    %v655 = vand.u32 %v91, 4294901760
    %656 = vmatpush1.xpose.msra.mxu0 %v655
    %657 = vmatprep.subr.mxu0 0.0
    %v658 = vand.u32 %v88, 4294901760
    %659 = vmatpush1.xpose.msra.mxu0 %v658
    %660 = vmatprep.subr.mxu0 0.0
    %v661 = vand.u32 %v85, 4294901760
    %662 = vmatpush1.xpose.msra.mxu0 %v661
    %663 = vmatprep.subr.mxu0 0.0
    %v664 = vand.u32 %v82, 4294901760
    %665 = vmatpush1.xpose.msra.mxu0 %v664
    %666 = vmatprep.subr.mxu0 0.0
    %v667 = vand.u32 %v79, 4294901760
    %668 = vmatpush1.xpose.msra.mxu0 %v667
    %669 = vmatprep.subr.mxu0 0.0
    %v670 = vand.u32 %v76, 4294901760
    %671 = vmatpush1.xpose.msra.mxu0 %v670
    %672 = vmatprep.subr.mxu0 0.0
    %v673 = vand.u32 %v73, 4294901760
    %674 = vmatpush1.xpose.msra.mxu0 %v673
    %675 = vmatprep.subr.mxu0 0.0
    %v676 = vand.u32 %v70, 4294901760
    %677 = vmatpush1.xpose.msra.mxu0 %v676
    %678 = vmatprep.subr.mxu0 0.0
    %v679 = vand.u32 %v67, 4294901760
    %680 = vmatpush1.xpose.msra.mxu0 %v679
    %681 = vmatprep.subr.mxu0 0.0
    %v682 = vand.u32 %v64, 4294901760
    %683 = vmatpush1.xpose.msra.mxu0 %v682
    %684 = vmatprep.subr.mxu0 0.0
    %v685 = vand.u32 %v157, 4294901760
    %686 = vmatpush2.xpose.msra.mxu0 %v685
    %687 = vmatprep.subr.mxu0 0.0
    %v688 = vand.u32 %v154, 4294901760
    %689 = vmatpush2.xpose.msra.mxu0 %v688
    %690 = vmatprep.subr.mxu0 0.0
    %v691 = vand.u32 %v151, 4294901760
    %692 = vmatpush2.xpose.msra.mxu0 %v691
    %693 = vmatprep.subr.mxu0 0.0
    %v694 = vand.u32 %v148, 4294901760
    %695 = vmatpush2.xpose.msra.mxu0 %v694
    %696 = vmatprep.subr.mxu0 0.0
    %v697 = vand.u32 %v145, 4294901760
    %698 = vmatpush2.xpose.msra.mxu0 %v697
    %699 = vmatprep.subr.mxu0 0.0
    %v700 = vand.u32 %v142, 4294901760
    %701 = vmatpush2.xpose.msra.mxu0 %v700
    %702 = vmatprep.subr.mxu0 0.0
    %v703 = vand.u32 %v139, 4294901760
    %704 = vmatpush2.xpose.msra.mxu0 %v703
    %705 = vmatprep.subr.mxu0 0.0
    %v706 = vand.u32 %v136, 4294901760
    %707 = vmatpush2.xpose.msra.mxu0 %v706
    %708 = vmatprep.subr.mxu0 0.0
    %v709 = vand.u32 %v133, 4294901760
    %710 = vmatpush2.xpose.msra.mxu0 %v709
    %711 = vmatprep.subr.mxu0 0.0
    %v712 = vand.u32 %v130, 4294901760
    %713 = vmatpush2.xpose.msra.mxu0 %v712
    %714 = vmatprep.subr.mxu0 0.0
    %v715 = vand.u32 %v127, 4294901760
    %716 = vmatpush2.xpose.msra.mxu0 %v715
    %717 = vmatprep.subr.mxu0 0.0
    %v718 = vand.u32 %v124, 4294901760
    %719 = vmatpush2.xpose.msra.mxu0 %v718
    %720 = vmatprep.subr.mxu0 0.0
    %v721 = vand.u32 %v121, 4294901760
    %722 = vmatpush2.xpose.msra.mxu0 %v721
    %723 = vmatprep.subr.mxu0 0.0
    %v724 = vand.u32 %v118, 4294901760
    %725 = vmatpush2.xpose.msra.mxu0 %v724
    %726 = vmatprep.subr.mxu0 0.0
    %v727 = vand.u32 %v115, 4294901760
    %728 = vmatpush2.xpose.msra.mxu0 %v727
    %729 = vmatprep.subr.mxu0 0.0
    %v730 = vand.u32 %v112, 4294901760
    %731 = vmatpush2.xpose.msra.mxu0 %v730
    %732 = vmatprep.mubr.f32.mxu0 0.0
    %v733 = vand.u32 %v61, 4294901760
    %v734 = vsub.f32 %v61, %v733
    %v735 = vand.u32 %v734, 4294901760
    %736 = vmatmul.mubr.f32.gmra.mxu0 %v735
    %v737 = vpop.f32.mrf.mxu0
    %v738 = vadd.f32 %v632, %v737
    %v739 = vpop.f32.mrf.mxu0
    %v740 = vadd.f32 %v634, %v739
    %741 = vdwg.mxu0
    %742 = vmatprep.subr.mxu0 0.0
    %v743 = vand.u32 %v109, 4294901760
    %v744 = vsub.f32 %v109, %v743
    %v745 = vand.u32 %v744, 4294901760
    %746 = vmatpush1.xpose.msra.mxu0 %v745
    %747 = vmatprep.subr.mxu0 0.0
    %v748 = vand.u32 %v106, 4294901760
    %v749 = vsub.f32 %v106, %v748
    %v750 = vand.u32 %v749, 4294901760
    %751 = vmatpush1.xpose.msra.mxu0 %v750
    %752 = vmatprep.subr.mxu0 0.0
    %v753 = vand.u32 %v103, 4294901760
    %v754 = vsub.f32 %v103, %v753
    %v755 = vand.u32 %v754, 4294901760
    %756 = vmatpush1.xpose.msra.mxu0 %v755
    %757 = vmatprep.subr.mxu0 0.0
    %v758 = vand.u32 %v100, 4294901760
    %v759 = vsub.f32 %v100, %v758
    %v760 = vand.u32 %v759, 4294901760
    %761 = vmatpush1.xpose.msra.mxu0 %v760
    %762 = vmatprep.subr.mxu0 0.0
    %v763 = vand.u32 %v97, 4294901760
    %v764 = vsub.f32 %v97, %v763
    %v765 = vand.u32 %v764, 4294901760
    %766 = vmatpush1.xpose.msra.mxu0 %v765
    %767 = vmatprep.subr.mxu0 0.0
    %v768 = vand.u32 %v94, 4294901760
    %v769 = vsub.f32 %v94, %v768
    %v770 = vand.u32 %v769, 4294901760
    %771 = vmatpush1.xpose.msra.mxu0 %v770
    %772 = vmatprep.subr.mxu0 0.0
    %v773 = vand.u32 %v91, 4294901760
    %v774 = vsub.f32 %v91, %v773
    %v775 = vand.u32 %v774, 4294901760
    %776 = vmatpush1.xpose.msra.mxu0 %v775
    %777 = vmatprep.subr.mxu0 0.0
    %v778 = vand.u32 %v88, 4294901760
    %v779 = vsub.f32 %v88, %v778
    %v780 = vand.u32 %v779, 4294901760
    %781 = vmatpush1.xpose.msra.mxu0 %v780
    %782 = vmatprep.subr.mxu0 0.0
    %v783 = vand.u32 %v85, 4294901760
    %v784 = vsub.f32 %v85, %v783
    %v785 = vand.u32 %v784, 4294901760
    %786 = vmatpush1.xpose.msra.mxu0 %v785
    %787 = vmatprep.subr.mxu0 0.0
    %v788 = vand.u32 %v82, 4294901760
    %v789 = vsub.f32 %v82, %v788
    %v790 = vand.u32 %v789, 4294901760
    %791 = vmatpush1.xpose.msra.mxu0 %v790
    %792 = vmatprep.subr.mxu0 0.0
    %v793 = vand.u32 %v79, 4294901760
    %v794 = vsub.f32 %v79, %v793
    %v795 = vand.u32 %v794, 4294901760
    %796 = vmatpush1.xpose.msra.mxu0 %v795
    %797 = vmatprep.subr.mxu0 0.0
    %v798 = vand.u32 %v76, 4294901760
    %v799 = vsub.f32 %v76, %v798
    %v800 = vand.u32 %v799, 4294901760
    %801 = vmatpush1.xpose.msra.mxu0 %v800
    %802 = vmatprep.subr.mxu0 0.0
    %v803 = vand.u32 %v73, 4294901760
    %v804 = vsub.f32 %v73, %v803
    %v805 = vand.u32 %v804, 4294901760
    %806 = vmatpush1.xpose.msra.mxu0 %v805
    %807 = vmatprep.subr.mxu0 0.0
    %v808 = vand.u32 %v70, 4294901760
    %v809 = vsub.f32 %v70, %v808
    %v810 = vand.u32 %v809, 4294901760
    %811 = vmatpush1.xpose.msra.mxu0 %v810
    %812 = vmatprep.subr.mxu0 0.0
    %v813 = vand.u32 %v67, 4294901760
    %v814 = vsub.f32 %v67, %v813
    %v815 = vand.u32 %v814, 4294901760
    %816 = vmatpush1.xpose.msra.mxu0 %v815
    %817 = vmatprep.subr.mxu0 0.0
    %v818 = vand.u32 %v64, 4294901760
    %v819 = vsub.f32 %v64, %v818
    %v820 = vand.u32 %v819, 4294901760
    %821 = vmatpush1.xpose.msra.mxu0 %v820
    %822 = vmatprep.subr.mxu0 0.0
    %v823 = vand.u32 %v157, 4294901760
    %v824 = vsub.f32 %v157, %v823
    %v825 = vand.u32 %v824, 4294901760
    %826 = vmatpush2.xpose.msra.mxu0 %v825
    %827 = vmatprep.subr.mxu0 0.0
    %v828 = vand.u32 %v154, 4294901760
    %v829 = vsub.f32 %v154, %v828
    %v830 = vand.u32 %v829, 4294901760
    %831 = vmatpush2.xpose.msra.mxu0 %v830
    %832 = vmatprep.subr.mxu0 0.0
    %v833 = vand.u32 %v151, 4294901760
    %v834 = vsub.f32 %v151, %v833
    %v835 = vand.u32 %v834, 4294901760
    %836 = vmatpush2.xpose.msra.mxu0 %v835
    %837 = vmatprep.subr.mxu0 0.0
    %v838 = vand.u32 %v148, 4294901760
    %v839 = vsub.f32 %v148, %v838
    %v840 = vand.u32 %v839, 4294901760
    %841 = vmatpush2.xpose.msra.mxu0 %v840
    %842 = vmatprep.subr.mxu0 0.0
    %v843 = vand.u32 %v145, 4294901760
    %v844 = vsub.f32 %v145, %v843
    %v845 = vand.u32 %v844, 4294901760
    %846 = vmatpush2.xpose.msra.mxu0 %v845
    %847 = vmatprep.subr.mxu0 0.0
    %v848 = vand.u32 %v142, 4294901760
    %v849 = vsub.f32 %v142, %v848
    %v850 = vand.u32 %v849, 4294901760
    %851 = vmatpush2.xpose.msra.mxu0 %v850
    %852 = vmatprep.subr.mxu0 0.0
    %v853 = vand.u32 %v139, 4294901760
    %v854 = vsub.f32 %v139, %v853
    %v855 = vand.u32 %v854, 4294901760
    %856 = vmatpush2.xpose.msra.mxu0 %v855
    %857 = vmatprep.subr.mxu0 0.0
    %v858 = vand.u32 %v136, 4294901760
    %v859 = vsub.f32 %v136, %v858
    %v860 = vand.u32 %v859, 4294901760
    %861 = vmatpush2.xpose.msra.mxu0 %v860
    %862 = vmatprep.subr.mxu0 0.0
    %v863 = vand.u32 %v133, 4294901760
    %v864 = vsub.f32 %v133, %v863
    %v865 = vand.u32 %v864, 4294901760
    %866 = vmatpush2.xpose.msra.mxu0 %v865
    %867 = vmatprep.subr.mxu0 0.0
    %v868 = vand.u32 %v130, 4294901760
    %v869 = vsub.f32 %v130, %v868
    %v870 = vand.u32 %v869, 4294901760
    %871 = vmatpush2.xpose.msra.mxu0 %v870
    %872 = vmatprep.subr.mxu0 0.0
    %v873 = vand.u32 %v127, 4294901760
    %v874 = vsub.f32 %v127, %v873
    %v875 = vand.u32 %v874, 4294901760
    %876 = vmatpush2.xpose.msra.mxu0 %v875
    %877 = vmatprep.subr.mxu0 0.0
    %v878 = vand.u32 %v124, 4294901760
    %v879 = vsub.f32 %v124, %v878
    %v880 = vand.u32 %v879, 4294901760
    %881 = vmatpush2.xpose.msra.mxu0 %v880
    %882 = vmatprep.subr.mxu0 0.0
    %v883 = vand.u32 %v121, 4294901760
    %v884 = vsub.f32 %v121, %v883
    %v885 = vand.u32 %v884, 4294901760
    %886 = vmatpush2.xpose.msra.mxu0 %v885
    %887 = vmatprep.subr.mxu0 0.0
    %v888 = vand.u32 %v118, 4294901760
    %v889 = vsub.f32 %v118, %v888
    %v890 = vand.u32 %v889, 4294901760
    %891 = vmatpush2.xpose.msra.mxu0 %v890
    %892 = vmatprep.subr.mxu0 0.0
    %v893 = vand.u32 %v115, 4294901760
    %v894 = vsub.f32 %v115, %v893
    %v895 = vand.u32 %v894, 4294901760
    %896 = vmatpush2.xpose.msra.mxu0 %v895
    %897 = vmatprep.subr.mxu0 0.0
    %v898 = vand.u32 %v112, 4294901760
    %v899 = vsub.f32 %v112, %v898
    %v900 = vand.u32 %v899, 4294901760
    %901 = vmatpush2.xpose.msra.mxu0 %v900
    %902 = vmatprep.mubr.f32.mxu0 0.0
    %v903 = vand.u32 %v61, 4294901760
    %904 = vmatmul.mubr.f32.gmra.mxu0 %v903
    %v905 = vpop.f32.mrf.mxu0
    %v906 = vadd.f32 %v738, %v905
    %v907 = vpop.f32.mrf.mxu0
    %v908 = vadd.f32 %v740, %v907
    %909 = vdwg.mxu0
    %910 = vmatprep.subr.mxu0 0.0
    %v911 = vand.u32 %v109, 4294901760
    %912 = vmatpush1.xpose.msra.mxu0 %v911
    %913 = vmatprep.subr.mxu0 0.0
    %v914 = vand.u32 %v106, 4294901760
    %915 = vmatpush1.xpose.msra.mxu0 %v914
    %916 = vmatprep.subr.mxu0 0.0
    %v917 = vand.u32 %v103, 4294901760
    %918 = vmatpush1.xpose.msra.mxu0 %v917
    %919 = vmatprep.subr.mxu0 0.0
    %v920 = vand.u32 %v100, 4294901760
    %921 = vmatpush1.xpose.msra.mxu0 %v920
    %922 = vmatprep.subr.mxu0 0.0
    %v923 = vand.u32 %v97, 4294901760
    %924 = vmatpush1.xpose.msra.mxu0 %v923
    %925 = vmatprep.subr.mxu0 0.0
    %v926 = vand.u32 %v94, 4294901760
    %927 = vmatpush1.xpose.msra.mxu0 %v926
    %928 = vmatprep.subr.mxu0 0.0
    %v929 = vand.u32 %v91, 4294901760
    %930 = vmatpush1.xpose.msra.mxu0 %v929
    %931 = vmatprep.subr.mxu0 0.0
    %v932 = vand.u32 %v88, 4294901760
    %933 = vmatpush1.xpose.msra.mxu0 %v932
    %934 = vmatprep.subr.mxu0 0.0
    %v935 = vand.u32 %v85, 4294901760
    %936 = vmatpush1.xpose.msra.mxu0 %v935
    %937 = vmatprep.subr.mxu0 0.0
    %v938 = vand.u32 %v82, 4294901760
    %939 = vmatpush1.xpose.msra.mxu0 %v938
    %940 = vmatprep.subr.mxu0 0.0
    %v941 = vand.u32 %v79, 4294901760
    %942 = vmatpush1.xpose.msra.mxu0 %v941
    %943 = vmatprep.subr.mxu0 0.0
    %v944 = vand.u32 %v76, 4294901760
    %945 = vmatpush1.xpose.msra.mxu0 %v944
    %946 = vmatprep.subr.mxu0 0.0
    %v947 = vand.u32 %v73, 4294901760
    %948 = vmatpush1.xpose.msra.mxu0 %v947
    %949 = vmatprep.subr.mxu0 0.0
    %v950 = vand.u32 %v70, 4294901760
    %951 = vmatpush1.xpose.msra.mxu0 %v950
    %952 = vmatprep.subr.mxu0 0.0
    %v953 = vand.u32 %v67, 4294901760
    %954 = vmatpush1.xpose.msra.mxu0 %v953
    %955 = vmatprep.subr.mxu0 0.0
    %v956 = vand.u32 %v64, 4294901760
    %957 = vmatpush1.xpose.msra.mxu0 %v956
    %958 = vmatprep.subr.mxu0 0.0
    %v959 = vand.u32 %v157, 4294901760
    %960 = vmatpush2.xpose.msra.mxu0 %v959
    %961 = vmatprep.subr.mxu0 0.0
    %v962 = vand.u32 %v154, 4294901760
    %963 = vmatpush2.xpose.msra.mxu0 %v962
    %964 = vmatprep.subr.mxu0 0.0
    %v965 = vand.u32 %v151, 4294901760
    %966 = vmatpush2.xpose.msra.mxu0 %v965
    %967 = vmatprep.subr.mxu0 0.0
    %v968 = vand.u32 %v148, 4294901760
    %969 = vmatpush2.xpose.msra.mxu0 %v968
    %970 = vmatprep.subr.mxu0 0.0
    %v971 = vand.u32 %v145, 4294901760
    %972 = vmatpush2.xpose.msra.mxu0 %v971
    %973 = vmatprep.subr.mxu0 0.0
    %v974 = vand.u32 %v142, 4294901760
    %975 = vmatpush2.xpose.msra.mxu0 %v974
    %976 = vmatprep.subr.mxu0 0.0
    %v977 = vand.u32 %v139, 4294901760
    %978 = vmatpush2.xpose.msra.mxu0 %v977
    %979 = vmatprep.subr.mxu0 0.0
    %v980 = vand.u32 %v136, 4294901760
    %981 = vmatpush2.xpose.msra.mxu0 %v980
    %982 = vmatprep.subr.mxu0 0.0
    %v983 = vand.u32 %v133, 4294901760
    %984 = vmatpush2.xpose.msra.mxu0 %v983
    %985 = vmatprep.subr.mxu0 0.0
    %v986 = vand.u32 %v130, 4294901760
    %987 = vmatpush2.xpose.msra.mxu0 %v986
    %988 = vmatprep.subr.mxu0 0.0
    %v989 = vand.u32 %v127, 4294901760
    %990 = vmatpush2.xpose.msra.mxu0 %v989
    %991 = vmatprep.subr.mxu0 0.0
    %v992 = vand.u32 %v124, 4294901760
    %993 = vmatpush2.xpose.msra.mxu0 %v992
    %994 = vmatprep.subr.mxu0 0.0
    %v995 = vand.u32 %v121, 4294901760
    %996 = vmatpush2.xpose.msra.mxu0 %v995
    %997 = vmatprep.subr.mxu0 0.0
    %v998 = vand.u32 %v118, 4294901760
    %999 = vmatpush2.xpose.msra.mxu0 %v998
    %1000 = vmatprep.subr.mxu0 0.0
    %v1001 = vand.u32 %v115, 4294901760
    %1002 = vmatpush2.xpose.msra.mxu0 %v1001
    %1003 = vmatprep.subr.mxu0 0.0
    %v1004 = vand.u32 %v112, 4294901760
    %1005 = vmatpush2.xpose.msra.mxu0 %v1004
    %1006 = vmatprep.mubr.f32.mxu0 0.0
    %v1007 = vand.u32 %v61, 4294901760
    %1008 = vmatmul.mubr.f32.gmra.mxu0 %v1007
    %v1009 = vpop.f32.mrf.mxu0
    %v1010 = vadd.f32 %v906, %v1009
    %v1011 = vpop.f32.mrf.mxu0
    %v1012 = vadd.f32 %v908, %v1011
    %1013 = vdwg.mxu0
    %v1016 = vcombine.low %v1010, %v1012
    %v1018 = vunpack.c.l.s4 1966171168
    %v1019 = vunpack.c.0.s8 %v1018
    %v1020 = vlaneseq
    %v1021 = vshrl.u32 %v1020, 7
    %v1022 = vsub.s32 %v1019, %v1021
    %v1023 = vrot.slane %v1016, %v1022
    %v1025 = vunpack.c.l.s4 1966171168
    %v1026 = vunpack.c.0.s8 %v1025
    %v1027 = vlaneseq
    %v1028 = vshrl.u32 %v1027, 7
    %v1029 = vsub.s32 %v1026, %v1028
    %v1030 = vrot.slane %v1023, %v1029
    %v1032 = vadd.f32 %v58, %v1030
    %v1033 = vlaneseq
    %vm1034 = vcmp.ge.s32.totalorder %v1033, 0
    %vm1035 = vcmp.lt.s32.totalorder %v1033, 256
    %vm1036 = vmand %vm1034, %vm1035
    %1037 = vst.msk [vmem:[#allocation2] sm:$0x3] %vm1036, %v1032
    // Predicated region
    $region18: #{tpu_custom_call.1} parent=1 // pred_check
      %p1038 = pneg %p16
    $region19: #{tpu_custom_call.1} parent=1 // pred_check_branch
      %1040 = sbr.rel (%p1038) target = $region21
    $region20: #{tpu_custom_call.1} parent=1 // pred_region
      %v1041 = vld [vmem:[#allocation2] sm:$0x3]
      %s1042 = sld [smem:[#allocation3]]
      %v1043 = vstv %s1042
      %v1044 = vadd.f32 %v1041, %v1043
      %1045 = vst.msk [vmem:[#allocation4] sm:$0x3] %vm1036, %v1044
    $region21: #{tpu_custom_call.1} parent=1 // pred_fallthru
      _
    // Predicated region
    $region22: #{tpu_custom_call.1} parent=1 // pred_check
      _
    $region23: #{tpu_custom_call.1} parent=1 // pred_check_branch
      %1047 = sbr.rel (0) target = $region25
    $region24: #{tpu_custom_call.1} parent=1 // pred_region
      %s1049 = ssub.s32 32, 32
      %1050 = vsyncadd [#allocation5], %s1049
      %s1052 = sshll.u32 [#allocation4], 4
      %s1053 = int_to_ptr.vmem [resolvable:$true] %s1052
      %1055 = dma.vmem_to_hbm [thread:$0]  %s1053, 32, %s3, [#allocation5]
    $region25: #{tpu_custom_call.1} parent=1 // pred_fallthru
      _
    // Predicated region
    $region26: #{tpu_custom_call.1} parent=1 // pred_check
      _
    $region27: #{tpu_custom_call.1} parent=1 // pred_check_branch
      %1057 = sbr.rel (0) target = $region29
    $region28: #{tpu_custom_call.1} parent=1 // pred_region
      %1058 = dma.done [#allocation5], 32
    $region29: #{tpu_custom_call.1} parent=1 // pred_fallthru
      _
    %1059 = vsyncpa [#allocation5], 1

</llo_original>
